<compile_context>
chip_gen: v7x
topology: tpu7x:2x2x1
jax: 0.10.0
libtpu: 0.0.40
codegen_flags: <defaults>
</compile_context>

<pallas_src>
import functools

import jax
import jax.numpy as jnp
from jax.experimental import pallas as pl
from jax.experimental.pallas import tpu as pltpu


_TARGET_TILE_BYTES = 4 << 20       # ~4 MiB per buffer (double-buffered in+out
                                   #  => ~16 MiB + headroom, fits every gen)
_SMALL_BYPASS_ELEMS = 128 * 1024   # below this, fused XLA is strictly faster


def _sublane_multiple(dtype):
    """Packed-sublane granularity: 8 (f32), 16 (bf16), 32 (int8/fp8)."""
    return max(8, 32 // jnp.dtype(dtype).itemsize)


def _choose_lanes(n):
    """Largest lane-dense column count that divides n (zero-copy 2-D view)."""
    for c in (1024, 512, 256, 128):
        if n % c == 0:
            return c
    return None


def _plan_tile_rows(rows, lanes, dtype):
    """Tile rows: single full-extent block if it fits ~4 MiB, else max tile."""
    sub = _sublane_multiple(dtype)
    itemsize = jnp.dtype(dtype).itemsize
    max_rows = max(sub, (_TARGET_TILE_BYTES // (lanes * itemsize)) // sub * sub)
    if rows <= max_rows:
        return rows            # block == full array extent -> always legal
    return max_rows            # multiple of sublane granule; boundary masked


# ----------------------------------------------------------------------------
# Pallas kernel: elementwise quantization  y = round(x * scale) * inv_scale
# Compute in f32 in-vreg; I/O stays in the caller's dtype.
# ----------------------------------------------------------------------------
def _qt_kernel(x_ref, o_ref, *, scale, inv_scale):
    x = x_ref[...].astype(jnp.float32)
    o_ref[...] = (jnp.round(x * scale) * inv_scale).astype(o_ref.dtype)


def _qt_pallas(x2d, q_bits):
    """x2d: [rows, lanes]; lanes is a multiple of 128 (lane-dense slab)."""
    rows, lanes = x2d.shape
    dtype = x2d.dtype
    itemsize = jnp.dtype(dtype).itemsize

    scale = float(2 ** (q_bits - 1))
    inv_scale = 1.0 / scale

    tr = _plan_tile_rows(rows, lanes, dtype)
    grid = (pl.cdiv(rows, tr),)          # boundary block masked by Pallas

    tile_bytes = tr * lanes * itemsize
    # 2 buffers for the input + 2 for the output, plus headroom for Mosaic.
    vmem_limit = int(4 * tile_bytes + (4 << 20))

    nelem = rows * lanes
    cost = pl.CostEstimate(
        flops=2 * nelem,                 # mul + mul (round ~free on VPU)
        transcendentals=0,
        bytes_accessed=2 * nelem * itemsize,
    )

    return pl.pallas_call(
        functools.partial(_qt_kernel, scale=scale, inv_scale=inv_scale),
        out_shape=jax.ShapeDtypeStruct((rows, lanes), dtype),
        grid_spec=pltpu.PrefetchScalarGridSpec(
            num_scalar_prefetch=0,
            grid=grid,
            in_specs=[pl.BlockSpec((tr, lanes), lambda i: (i, 0))],
            out_specs=pl.BlockSpec((tr, lanes), lambda i: (i, 0)),
        ),
        compiler_params=pltpu.CompilerParams(
            dimension_semantics=("parallel",),
            vmem_limit_bytes=vmem_limit,
        ),
        cost_estimate=cost,
    )(x2d)


# ----------------------------------------------------------------------------
# Reference / fallback path: one fused XLA elementwise pass (optimal traffic).
# ----------------------------------------------------------------------------
def _quantize_jnp(x, q_bits):
    scale = jnp.float32(2.0 ** (q_bits - 1))
    inv_scale = jnp.float32(1.0 / float(2 ** (q_bits - 1)))
    xf = x.astype(jnp.float32)
    return (jnp.round(xf * scale) * inv_scale).astype(x.dtype)


def bpda_forward(x, q_bits=8):
    """ori_f: QT_Non_Diff quantization; Pallas kernel on the hot path."""
    n = x.size
    if n < _SMALL_BYPASS_ELEMS:
        # Tiny tensors: kernel launch + dispatch overhead dominates.
        return _quantize_jnp(x, q_bits)

    lanes = _choose_lanes(n)
    if lanes is None:
        # TODO(synk): sizes not divisible by 128 have no zero-copy lane-dense
        # view; the fused XLA pass already matches the kernel's HBM traffic
        # (and avoids the old pad/slice passes), so use it directly.
        return _quantize_jnp(x, q_bits)

    rows = n // lanes
    x2d = x.reshape(rows, lanes)          # zero-copy bitcast reshape
    y2d = _qt_pallas(x2d, q_bits)
    return y2d.reshape(x.shape)           # zero-copy bitcast reshape


# ----------------------------------------------------------------------------
# BPDA: forward = ori_f (Pallas kernel), backward = grad of sub_f (identity)
# ----------------------------------------------------------------------------
@functools.partial(jax.custom_vjp, nondiff_argnums=(1,))
def bpda_apply(x, q_bits=8):
    return bpda_forward(x, q_bits)


def _bpda_fwd(x, q_bits):
    return bpda_forward(x, q_bits), None


def _bpda_bwd(q_bits, _res, g):
    # sub_f = identity  ->  straight-through gradient (BPDA).
    return (g,)


bpda_apply.defvjp(_bpda_fwd, _bpda_bwd)


class BPDA:
    """Mirrors the PyTorch BPDA module: forward applies ori_f; backward uses sub_f."""

    def __init__(self, q_bits=8):
        self.q_bits = q_bits

    def __call__(self, x):
        return bpda_apply(x, self.q_bits)


# ----------------------------------------------------------------------------
if __name__ == "__main__":
    model = BPDA(q_bits=8)
    scale = 2.0 ** (8 - 1)
    key = jax.random.PRNGKey(0)
    k0, k1, k2, k3, k4 = jax.random.split(key, 5)

    # 1) Tiny NCHW demo input -> small-input bypass (single fused XLA pass).
    x_small = jax.random.uniform(k0, (2, 4, 16, 16), jnp.float32, -1.0, 1.0)
    y_small = jax.block_until_ready(model(x_small))
    assert y_small.shape == x_small.shape and y_small.dtype == x_small.dtype
    assert jnp.array_equal(y_small, jnp.round(x_small * scale) / scale)

    # 2) Lane-aligned "waveform" -> Pallas kernel, single full-extent block.
    x_wave = jax.random.uniform(k1, (4, 65536), jnp.float32, -1.0, 1.0)
    y_wave = jax.block_until_ready(model(x_wave))
    assert jnp.array_equal(y_wave, jnp.round(x_wave * scale) / scale)

    # 3) Multi-step grid with a masked boundary block (1536 rows, 1024-row tiles).
    x_big = jax.random.uniform(k2, (3, 512, 1024), jnp.float32, -1.0, 1.0)
    y_big = jax.block_until_ready(model(x_big))
    assert jnp.array_equal(y_big, jnp.round(x_big * scale) / scale)

    # 4) bf16 input -> kernel path with packed-sublane tiling, f32 math in-vreg.
    x_bf16 = jax.random.uniform(k3, (4, 65536), jnp.float32, -1.0, 1.0).astype(jnp.bfloat16)
    y_bf16 = jax.block_until_ready(model(x_bf16))
    assert y_bf16.dtype == jnp.bfloat16
    assert jnp.array_equal(y_bf16, _quantize_jnp(x_bf16, 8))

    # 5) Large but not 128-divisible -> fused fallback (no pad/slice passes).
    x_odd = jax.random.uniform(k4, (5, 30001), jnp.float32, -1.0, 1.0)
    y_odd = jax.block_until_ready(model(x_odd))
    assert jnp.array_equal(y_odd, jnp.round(x_odd * scale) / scale)

    # 6) BPDA backward: gradient of sub_f (identity) -> ones (through kernel path).
    g = jax.block_until_ready(jax.grad(lambda z: jnp.sum(model(z)))(x_wave))
    assert jnp.array_equal(g, jnp.ones_like(x_wave))

    print("KERNEL_OK")
</pallas_src>

<mosaic_0001>
module attributes {stable_mosaic.version = 11 : i64} {
  func.func @_qt_kernel(%arg0: i32, %arg1: memref<256x1024xf32, #tpu.memory_space<vmem>>, %arg2: memref<256x1024xf32, #tpu.memory_space<vmem>>) attributes {dimension_semantics = [#tpu.dimension_semantics<parallel>], iteration_bounds = array<i64: 1>, scalar_prefetch = 0 : i64, scratch_operands = 0 : i64, tpu.core_type = #tpu.core_type<tc>, window_params = [{transform_indices = @transform_0, window_bounds = array<i64: 256, 1024>}, {transform_indices = @transform_1, window_bounds = array<i64: 256, 1024>}]} {
    %c0 = arith.constant 0 : index
    %c0_0 = arith.constant 0 : index
    %0 = vector.load %arg1[%c0, %c0_0] : memref<256x1024xf32, #tpu.memory_space<vmem>>, vector<256x1024xf32>
    %cst = arith.constant 1.280000e+02 : f32
    %1 = vector.broadcast %cst : f32 to vector<256x1024xf32>
    %2 = arith.mulf %0, %1 : vector<256x1024xf32>
    %3 = math.roundeven %2 : vector<256x1024xf32>
    %cst_1 = arith.constant 7.812500e-03 : f32
    %4 = vector.broadcast %cst_1 : f32 to vector<256x1024xf32>
    %5 = arith.mulf %3, %4 : vector<256x1024xf32>
    %c0_2 = arith.constant 0 : index
    %c0_3 = arith.constant 0 : index
    %6 = vector.load %arg2[%c0_2, %c0_3] : memref<256x1024xf32, #tpu.memory_space<vmem>>, vector<256x1024xf32>
    tpu.vector_store %arg2[%c0_2, %c0_3], %5 {strides = array<i32>} : memref<256x1024xf32, #tpu.memory_space<vmem>>, vector<256x1024xf32>,
    return
  }
  func.func @transform_0(%arg0: i32) -> (i32, i32) {
    %c0_i32 = arith.constant 0 : i32
    %c0_i32_0 = arith.constant 0 : i32
    return %arg0, %c0_i32 : i32, i32
  }
  func.func @transform_1(%arg0: i32) -> (i32, i32) {
    %c0_i32 = arith.constant 0 : i32
    %c0_i32_0 = arith.constant 0 : i32
    return %arg0, %c0_i32 : i32, i32
  }
}

</mosaic_0001>

<llo_original>
// kernel: tpu_custom_call.1
$region0: #{tpu_custom_call.1}
  #allocation0 [shape = 'u32[]', space=smem, size = 0x4, offset = 0x4, fixed_abs, tag = 'smem constant byte address 0x4 - core index']
  #allocation1 [shape = 'u32[144,128]{1,0:T(1,128)}', space=vmem, size = 0x12000, scoped, tag = 'internal scratch']
  %s0 = inlined_call_operand.hbm [shape: f32[256,1024], index: 0, kind: input, shape index: {}]
  %s1 = inlined_call_operand.hbm [shape: f32[256,1024], index: 1, kind: output, shape index: {}]
  %s2 = sld [smem:[#allocation0]]
  $region18: #{tpu_custom_call.1} parent=0
    _
  %s4 = ssub.s32 1, %s2
  %s5 = scalar_select 0, %s4, %s2
  $region1: #{tpu_custom_call.1} parent=0
    #allocation2 [shape = 'u8[1048576]{0}', space=vmem, size = 0x100000, scoped, tag = 'input window, operand 0, single buffered']
    #allocation3 [shape = 's32[1]{0}', space=sflag, size = 0x4, scoped, tag = 'scoped memory for tpu_custom_call.1']
    #allocation4 [shape = 's32[1]{0}', space=sflag, size = 0x4, scoped, tag = 'scoped memory for tpu_custom_call.1']
    #allocation5 [shape = 'u8[1048576]{0}', space=vmem, size = 0x100000, scoped, tag = 'output window, operand 0, single buffered']
    %6 = vsyncpa [#allocation3], 0
    %7 = vsyncpa [#allocation4], 0
    // Predicated region
    $region2: #{tpu_custom_call.1} parent=1 // pred_check
      _
    $region3: #{tpu_custom_call.1} parent=1 // pred_check_branch
      %9 = sbr.rel (0) target = $region5
    $region4: #{tpu_custom_call.1} parent=1 // pred_region
      %s11 = ssub.s32 32768, 32768
      %12 = vsyncadd [#allocation3], %s11
      %s13 = sshll.u32 [#allocation2], 4
      %s14 = int_to_ptr.vmem [resolvable:$true] %s13
      %19 = dma.hbm_to_vmem [thread:$0]  %s0, 32768, %s14, [#allocation3], 1024, 1024, 64
    $region5: #{tpu_custom_call.1} parent=1 // pred_fallthru
      _
    // Predicated region
    $region6: #{tpu_custom_call.1} parent=1 // pred_check
      _
    $region7: #{tpu_custom_call.1} parent=1 // pred_check_branch
      %21 = sbr.rel (0) target = $region9
    $region8: #{tpu_custom_call.1} parent=1 // pred_region
      %22 = dma.done [#allocation3], 32768
    $region9: #{tpu_custom_call.1} parent=1 // pred_fallthru
      _
    %v23 = vld [vmem:[#allocation2] sm:$0xff]
    %v24 = vld [vmem:[#allocation2 + $0x8] sm:$0xff]
    %v25 = vld [vmem:[#allocation2 + $0x10] sm:$0xff]
    %v26 = vld [vmem:[#allocation2 + $0x18] sm:$0xff]
    %v27 = vld [vmem:[#allocation2 + $0x20] sm:$0xff]
    %v28 = vld [vmem:[#allocation2 + $0x28] sm:$0xff]
    %v29 = vld [vmem:[#allocation2 + $0x30] sm:$0xff]
    %v30 = vld [vmem:[#allocation2 + $0x38] sm:$0xff]
    %v31 = vld [vmem:[#allocation2 + $0x40] sm:$0xff]
    %v32 = vld [vmem:[#allocation2 + $0x48] sm:$0xff]
    %v33 = vld [vmem:[#allocation2 + $0x50] sm:$0xff]
    %v34 = vld [vmem:[#allocation2 + $0x58] sm:$0xff]
    %v35 = vld [vmem:[#allocation2 + $0x60] sm:$0xff]
    %v36 = vld [vmem:[#allocation2 + $0x68] sm:$0xff]
    %v37 = vld [vmem:[#allocation2 + $0x70] sm:$0xff]
    %v38 = vld [vmem:[#allocation2 + $0x78] sm:$0xff]
    %v39 = vld [vmem:[#allocation2 + $0x80] sm:$0xff]
    %v40 = vld [vmem:[#allocation2 + $0x88] sm:$0xff]
    %v41 = vld [vmem:[#allocation2 + $0x90] sm:$0xff]
    %v42 = vld [vmem:[#allocation2 + $0x98] sm:$0xff]
    %v43 = vld [vmem:[#allocation2 + $0xa0] sm:$0xff]
    %v44 = vld [vmem:[#allocation2 + $0xa8] sm:$0xff]
    %v45 = vld [vmem:[#allocation2 + $0xb0] sm:$0xff]
    %v46 = vld [vmem:[#allocation2 + $0xb8] sm:$0xff]
    %v47 = vld [vmem:[#allocation2 + $0xc0] sm:$0xff]
    %v48 = vld [vmem:[#allocation2 + $0xc8] sm:$0xff]
    %v49 = vld [vmem:[#allocation2 + $0xd0] sm:$0xff]
    %v50 = vld [vmem:[#allocation2 + $0xd8] sm:$0xff]
    %v51 = vld [vmem:[#allocation2 + $0xe0] sm:$0xff]
    %v52 = vld [vmem:[#allocation2 + $0xe8] sm:$0xff]
    %v53 = vld [vmem:[#allocation2 + $0xf0] sm:$0xff]
    %v54 = vld [vmem:[#allocation2 + $0xf8] sm:$0xff]
    %v55 = vld [vmem:[#allocation2 + $0x100] sm:$0xff]
    %v56 = vld [vmem:[#allocation2 + $0x108] sm:$0xff]
    %v57 = vld [vmem:[#allocation2 + $0x110] sm:$0xff]
    %v58 = vld [vmem:[#allocation2 + $0x118] sm:$0xff]
    %v59 = vld [vmem:[#allocation2 + $0x120] sm:$0xff]
    %v60 = vld [vmem:[#allocation2 + $0x128] sm:$0xff]
    %v61 = vld [vmem:[#allocation2 + $0x130] sm:$0xff]
    %v62 = vld [vmem:[#allocation2 + $0x138] sm:$0xff]
    %v63 = vld [vmem:[#allocation2 + $0x140] sm:$0xff]
    %v64 = vld [vmem:[#allocation2 + $0x148] sm:$0xff]
    %v65 = vld [vmem:[#allocation2 + $0x150] sm:$0xff]
    %v66 = vld [vmem:[#allocation2 + $0x158] sm:$0xff]
    %v67 = vld [vmem:[#allocation2 + $0x160] sm:$0xff]
    %v68 = vld [vmem:[#allocation2 + $0x168] sm:$0xff]
    %v69 = vld [vmem:[#allocation2 + $0x170] sm:$0xff]
    %v70 = vld [vmem:[#allocation2 + $0x178] sm:$0xff]
    %v71 = vld [vmem:[#allocation2 + $0x180] sm:$0xff]
    %v72 = vld [vmem:[#allocation2 + $0x188] sm:$0xff]
    %v73 = vld [vmem:[#allocation2 + $0x190] sm:$0xff]
    %v74 = vld [vmem:[#allocation2 + $0x198] sm:$0xff]
    %v75 = vld [vmem:[#allocation2 + $0x1a0] sm:$0xff]
    %v76 = vld [vmem:[#allocation2 + $0x1a8] sm:$0xff]
    %v77 = vld [vmem:[#allocation2 + $0x1b0] sm:$0xff]
    %v78 = vld [vmem:[#allocation2 + $0x1b8] sm:$0xff]
    %v79 = vld [vmem:[#allocation2 + $0x1c0] sm:$0xff]
    %v80 = vld [vmem:[#allocation2 + $0x1c8] sm:$0xff]
    %v81 = vld [vmem:[#allocation2 + $0x1d0] sm:$0xff]
    %v82 = vld [vmem:[#allocation2 + $0x1d8] sm:$0xff]
    %v83 = vld [vmem:[#allocation2 + $0x1e0] sm:$0xff]
    %v84 = vld [vmem:[#allocation2 + $0x1e8] sm:$0xff]
    %v85 = vld [vmem:[#allocation2 + $0x1f0] sm:$0xff]
    %v86 = vld [vmem:[#allocation2 + $0x1f8] sm:$0xff]
    %v87 = vld [vmem:[#allocation2 + $0x200] sm:$0xff]
    %v88 = vld [vmem:[#allocation2 + $0x208] sm:$0xff]
    %v89 = vld [vmem:[#allocation2 + $0x210] sm:$0xff]
    %v90 = vld [vmem:[#allocation2 + $0x218] sm:$0xff]
    %v91 = vld [vmem:[#allocation2 + $0x220] sm:$0xff]
    %v92 = vld [vmem:[#allocation2 + $0x228] sm:$0xff]
    %v93 = vld [vmem:[#allocation2 + $0x230] sm:$0xff]
    %v94 = vld [vmem:[#allocation2 + $0x238] sm:$0xff]
    %v95 = vld [vmem:[#allocation2 + $0x240] sm:$0xff]
    %v96 = vld [vmem:[#allocation2 + $0x248] sm:$0xff]
    %v97 = vld [vmem:[#allocation2 + $0x250] sm:$0xff]
    %v98 = vld [vmem:[#allocation2 + $0x258] sm:$0xff]
    %v99 = vld [vmem:[#allocation2 + $0x260] sm:$0xff]
    %v100 = vld [vmem:[#allocation2 + $0x268] sm:$0xff]
    %v101 = vld [vmem:[#allocation2 + $0x270] sm:$0xff]
    %v102 = vld [vmem:[#allocation2 + $0x278] sm:$0xff]
    %v103 = vld [vmem:[#allocation2 + $0x280] sm:$0xff]
    %v104 = vld [vmem:[#allocation2 + $0x288] sm:$0xff]
    %v105 = vld [vmem:[#allocation2 + $0x290] sm:$0xff]
    %v106 = vld [vmem:[#allocation2 + $0x298] sm:$0xff]
    %v107 = vld [vmem:[#allocation2 + $0x2a0] sm:$0xff]
    %v108 = vld [vmem:[#allocation2 + $0x2a8] sm:$0xff]
    %v109 = vld [vmem:[#allocation2 + $0x2b0] sm:$0xff]
    %v110 = vld [vmem:[#allocation2 + $0x2b8] sm:$0xff]
    %v111 = vld [vmem:[#allocation2 + $0x2c0] sm:$0xff]
    %v112 = vld [vmem:[#allocation2 + $0x2c8] sm:$0xff]
    %v113 = vld [vmem:[#allocation2 + $0x2d0] sm:$0xff]
    %v114 = vld [vmem:[#allocation2 + $0x2d8] sm:$0xff]
    %v115 = vld [vmem:[#allocation2 + $0x2e0] sm:$0xff]
    %v116 = vld [vmem:[#allocation2 + $0x2e8] sm:$0xff]
    %v117 = vld [vmem:[#allocation2 + $0x2f0] sm:$0xff]
    %v118 = vld [vmem:[#allocation2 + $0x2f8] sm:$0xff]
    %v119 = vld [vmem:[#allocation2 + $0x300] sm:$0xff]
    %v120 = vld [vmem:[#allocation2 + $0x308] sm:$0xff]
    %v121 = vld [vmem:[#allocation2 + $0x310] sm:$0xff]
    %v122 = vld [vmem:[#allocation2 + $0x318] sm:$0xff]
    %v123 = vld [vmem:[#allocation2 + $0x320] sm:$0xff]
    %v124 = vld [vmem:[#allocation2 + $0x328] sm:$0xff]
    %v125 = vld [vmem:[#allocation2 + $0x330] sm:$0xff]
    %v126 = vld [vmem:[#allocation2 + $0x338] sm:$0xff]
    %v127 = vld [vmem:[#allocation2 + $0x340] sm:$0xff]
    %v128 = vld [vmem:[#allocation2 + $0x348] sm:$0xff]
    %v129 = vld [vmem:[#allocation2 + $0x350] sm:$0xff]
    %v130 = vld [vmem:[#allocation2 + $0x358] sm:$0xff]
    %v131 = vld [vmem:[#allocation2 + $0x360] sm:$0xff]
    %v132 = vld [vmem:[#allocation2 + $0x368] sm:$0xff]
    %v133 = vld [vmem:[#allocation2 + $0x370] sm:$0xff]
    %v134 = vld [vmem:[#allocation2 + $0x378] sm:$0xff]
    %v135 = vld [vmem:[#allocation2 + $0x380] sm:$0xff]
    %v136 = vld [vmem:[#allocation2 + $0x388] sm:$0xff]
    %v137 = vld [vmem:[#allocation2 + $0x390] sm:$0xff]
    %v138 = vld [vmem:[#allocation2 + $0x398] sm:$0xff]
    %v139 = vld [vmem:[#allocation2 + $0x3a0] sm:$0xff]
    %v140 = vld [vmem:[#allocation2 + $0x3a8] sm:$0xff]
    %v141 = vld [vmem:[#allocation2 + $0x3b0] sm:$0xff]
    %v142 = vld [vmem:[#allocation2 + $0x3b8] sm:$0xff]
    %v143 = vld [vmem:[#allocation2 + $0x3c0] sm:$0xff]
    %v144 = vld [vmem:[#allocation2 + $0x3c8] sm:$0xff]
    %v145 = vld [vmem:[#allocation2 + $0x3d0] sm:$0xff]
    %v146 = vld [vmem:[#allocation2 + $0x3d8] sm:$0xff]
    %v147 = vld [vmem:[#allocation2 + $0x3e0] sm:$0xff]
    %v148 = vld [vmem:[#allocation2 + $0x3e8] sm:$0xff]
    %v149 = vld [vmem:[#allocation2 + $0x3f0] sm:$0xff]
    %v150 = vld [vmem:[#allocation2 + $0x3f8] sm:$0xff]
    %v151 = vld [vmem:[#allocation2 + $0x400] sm:$0xff]
    %v152 = vld [vmem:[#allocation2 + $0x408] sm:$0xff]
    %v153 = vld [vmem:[#allocation2 + $0x410] sm:$0xff]
    %v154 = vld [vmem:[#allocation2 + $0x418] sm:$0xff]
    %v155 = vld [vmem:[#allocation2 + $0x420] sm:$0xff]
    %v156 = vld [vmem:[#allocation2 + $0x428] sm:$0xff]
    %v157 = vld [vmem:[#allocation2 + $0x430] sm:$0xff]
    %v158 = vld [vmem:[#allocation2 + $0x438] sm:$0xff]
    %v159 = vld [vmem:[#allocation2 + $0x440] sm:$0xff]
    %v160 = vld [vmem:[#allocation2 + $0x448] sm:$0xff]
    %v161 = vld [vmem:[#allocation2 + $0x450] sm:$0xff]
    %v162 = vld [vmem:[#allocation2 + $0x458] sm:$0xff]
    %v163 = vld [vmem:[#allocation2 + $0x460] sm:$0xff]
    %v164 = vld [vmem:[#allocation2 + $0x468] sm:$0xff]
    %v165 = vld [vmem:[#allocation2 + $0x470] sm:$0xff]
    %v166 = vld [vmem:[#allocation2 + $0x478] sm:$0xff]
    %v167 = vld [vmem:[#allocation2 + $0x480] sm:$0xff]
    %v168 = vld [vmem:[#allocation2 + $0x488] sm:$0xff]
    %v169 = vld [vmem:[#allocation2 + $0x490] sm:$0xff]
    %v170 = vld [vmem:[#allocation2 + $0x498] sm:$0xff]
    %v171 = vld [vmem:[#allocation2 + $0x4a0] sm:$0xff]
    %v172 = vld [vmem:[#allocation2 + $0x4a8] sm:$0xff]
    %v173 = vld [vmem:[#allocation2 + $0x4b0] sm:$0xff]
    %v174 = vld [vmem:[#allocation2 + $0x4b8] sm:$0xff]
    %v175 = vld [vmem:[#allocation2 + $0x4c0] sm:$0xff]
    %v176 = vld [vmem:[#allocation2 + $0x4c8] sm:$0xff]
    %v177 = vld [vmem:[#allocation2 + $0x4d0] sm:$0xff]
    %v178 = vld [vmem:[#allocation2 + $0x4d8] sm:$0xff]
    %v179 = vld [vmem:[#allocation2 + $0x4e0] sm:$0xff]
    %v180 = vld [vmem:[#allocation2 + $0x4e8] sm:$0xff]
    %v181 = vld [vmem:[#allocation2 + $0x4f0] sm:$0xff]
    %v182 = vld [vmem:[#allocation2 + $0x4f8] sm:$0xff]
    %v183 = vld [vmem:[#allocation2 + $0x500] sm:$0xff]
    %v184 = vld [vmem:[#allocation2 + $0x508] sm:$0xff]
    %v185 = vld [vmem:[#allocation2 + $0x510] sm:$0xff]
    %v186 = vld [vmem:[#allocation2 + $0x518] sm:$0xff]
    %v187 = vld [vmem:[#allocation2 + $0x520] sm:$0xff]
    %v188 = vld [vmem:[#allocation2 + $0x528] sm:$0xff]
    %v189 = vld [vmem:[#allocation2 + $0x530] sm:$0xff]
    %v190 = vld [vmem:[#allocation2 + $0x538] sm:$0xff]
    %v191 = vld [vmem:[#allocation2 + $0x540] sm:$0xff]
    %v192 = vld [vmem:[#allocation2 + $0x548] sm:$0xff]
    %v193 = vld [vmem:[#allocation2 + $0x550] sm:$0xff]
    %v194 = vld [vmem:[#allocation2 + $0x558] sm:$0xff]
    %v195 = vld [vmem:[#allocation2 + $0x560] sm:$0xff]
    %v196 = vld [vmem:[#allocation2 + $0x568] sm:$0xff]
    %v197 = vld [vmem:[#allocation2 + $0x570] sm:$0xff]
    %v198 = vld [vmem:[#allocation2 + $0x578] sm:$0xff]
    %v199 = vld [vmem:[#allocation2 + $0x580] sm:$0xff]
    %v200 = vld [vmem:[#allocation2 + $0x588] sm:$0xff]
    %v201 = vld [vmem:[#allocation2 + $0x590] sm:$0xff]
    %v202 = vld [vmem:[#allocation2 + $0x598] sm:$0xff]
    %v203 = vld [vmem:[#allocation2 + $0x5a0] sm:$0xff]
    %v204 = vld [vmem:[#allocation2 + $0x5a8] sm:$0xff]
    %v205 = vld [vmem:[#allocation2 + $0x5b0] sm:$0xff]
    %v206 = vld [vmem:[#allocation2 + $0x5b8] sm:$0xff]
    %v207 = vld [vmem:[#allocation2 + $0x5c0] sm:$0xff]
    %v208 = vld [vmem:[#allocation2 + $0x5c8] sm:$0xff]
    %v209 = vld [vmem:[#allocation2 + $0x5d0] sm:$0xff]
    %v210 = vld [vmem:[#allocation2 + $0x5d8] sm:$0xff]
    %v211 = vld [vmem:[#allocation2 + $0x5e0] sm:$0xff]
    %v212 = vld [vmem:[#allocation2 + $0x5e8] sm:$0xff]
    %v213 = vld [vmem:[#allocation2 + $0x5f0] sm:$0xff]
    %v214 = vld [vmem:[#allocation2 + $0x5f8] sm:$0xff]
    %v215 = vld [vmem:[#allocation2 + $0x600] sm:$0xff]
    %v216 = vld [vmem:[#allocation2 + $0x608] sm:$0xff]
    %v217 = vld [vmem:[#allocation2 + $0x610] sm:$0xff]
    %v218 = vld [vmem:[#allocation2 + $0x618] sm:$0xff]
    %v219 = vld [vmem:[#allocation2 + $0x620] sm:$0xff]
    %v220 = vld [vmem:[#allocation2 + $0x628] sm:$0xff]
    %v221 = vld [vmem:[#allocation2 + $0x630] sm:$0xff]
    %v222 = vld [vmem:[#allocation2 + $0x638] sm:$0xff]
    %v223 = vld [vmem:[#allocation2 + $0x640] sm:$0xff]
    %v224 = vld [vmem:[#allocation2 + $0x648] sm:$0xff]
    %v225 = vld [vmem:[#allocation2 + $0x650] sm:$0xff]
    %v226 = vld [vmem:[#allocation2 + $0x658] sm:$0xff]
    %v227 = vld [vmem:[#allocation2 + $0x660] sm:$0xff]
    %v228 = vld [vmem:[#allocation2 + $0x668] sm:$0xff]
    %v229 = vld [vmem:[#allocation2 + $0x670] sm:$0xff]
    %v230 = vld [vmem:[#allocation2 + $0x678] sm:$0xff]
    %v231 = vld [vmem:[#allocation2 + $0x680] sm:$0xff]
    %v232 = vld [vmem:[#allocation2 + $0x688] sm:$0xff]
    %v233 = vld [vmem:[#allocation2 + $0x690] sm:$0xff]
    %v234 = vld [vmem:[#allocation2 + $0x698] sm:$0xff]
    %v235 = vld [vmem:[#allocation2 + $0x6a0] sm:$0xff]
    %v236 = vld [vmem:[#allocation2 + $0x6a8] sm:$0xff]
    %v237 = vld [vmem:[#allocation2 + $0x6b0] sm:$0xff]
    %v238 = vld [vmem:[#allocation2 + $0x6b8] sm:$0xff]
    %v239 = vld [vmem:[#allocation2 + $0x6c0] sm:$0xff]
    %v240 = vld [vmem:[#allocation2 + $0x6c8] sm:$0xff]
    %v241 = vld [vmem:[#allocation2 + $0x6d0] sm:$0xff]
    %v242 = vld [vmem:[#allocation2 + $0x6d8] sm:$0xff]
    %v243 = vld [vmem:[#allocation2 + $0x6e0] sm:$0xff]
    %v244 = vld [vmem:[#allocation2 + $0x6e8] sm:$0xff]
    %v245 = vld [vmem:[#allocation2 + $0x6f0] sm:$0xff]
    %v246 = vld [vmem:[#allocation2 + $0x6f8] sm:$0xff]
    %v247 = vld [vmem:[#allocation2 + $0x700] sm:$0xff]
    %v248 = vld [vmem:[#allocation2 + $0x708] sm:$0xff]
    %v249 = vld [vmem:[#allocation2 + $0x710] sm:$0xff]
    %v250 = vld [vmem:[#allocation2 + $0x718] sm:$0xff]
    %v251 = vld [vmem:[#allocation2 + $0x720] sm:$0xff]
    %v252 = vld [vmem:[#allocation2 + $0x728] sm:$0xff]
    %v253 = vld [vmem:[#allocation2 + $0x730] sm:$0xff]
    %v254 = vld [vmem:[#allocation2 + $0x738] sm:$0xff]
    %v255 = vld [vmem:[#allocation2 + $0x740] sm:$0xff]
    %v256 = vld [vmem:[#allocation2 + $0x748] sm:$0xff]
    %v257 = vld [vmem:[#allocation2 + $0x750] sm:$0xff]
    %v258 = vld [vmem:[#allocation2 + $0x758] sm:$0xff]
    %v259 = vld [vmem:[#allocation2 + $0x760] sm:$0xff]
    %v260 = vld [vmem:[#allocation2 + $0x768] sm:$0xff]
    %v261 = vld [vmem:[#allocation2 + $0x770] sm:$0xff]
    %v262 = vld [vmem:[#allocation2 + $0x778] sm:$0xff]
    %v263 = vld [vmem:[#allocation2 + $0x780] sm:$0xff]
    %v264 = vld [vmem:[#allocation2 + $0x788] sm:$0xff]
    %v265 = vld [vmem:[#allocation2 + $0x790] sm:$0xff]
    %v266 = vld [vmem:[#allocation2 + $0x798] sm:$0xff]
    %v267 = vld [vmem:[#allocation2 + $0x7a0] sm:$0xff]
    %v268 = vld [vmem:[#allocation2 + $0x7a8] sm:$0xff]
    %v269 = vld [vmem:[#allocation2 + $0x7b0] sm:$0xff]
    %v270 = vld [vmem:[#allocation2 + $0x7b8] sm:$0xff]
    %v271 = vld [vmem:[#allocation2 + $0x7c0] sm:$0xff]
    %v272 = vld [vmem:[#allocation2 + $0x7c8] sm:$0xff]
    %v273 = vld [vmem:[#allocation2 + $0x7d0] sm:$0xff]
    %v274 = vld [vmem:[#allocation2 + $0x7d8] sm:$0xff]
    %v275 = vld [vmem:[#allocation2 + $0x7e0] sm:$0xff]
    %v276 = vld [vmem:[#allocation2 + $0x7e8] sm:$0xff]
    %v277 = vld [vmem:[#allocation2 + $0x7f0] sm:$0xff]
    %v278 = vld [vmem:[#allocation2 + $0x7f8] sm:$0xff]
    %v279 = vmul.f32 %v23, 128.0
    %v280 = vmul.f32 %v24, 128.0
    %v281 = vmul.f32 %v25, 128.0
    %v282 = vmul.f32 %v26, 128.0
    %v283 = vmul.f32 %v27, 128.0
    %v284 = vmul.f32 %v28, 128.0
    %v285 = vmul.f32 %v29, 128.0
    %v286 = vmul.f32 %v30, 128.0
    %v287 = vmul.f32 %v31, 128.0
    %v288 = vmul.f32 %v32, 128.0
    %v289 = vmul.f32 %v33, 128.0
    %v290 = vmul.f32 %v34, 128.0
    %v291 = vmul.f32 %v35, 128.0
    %v292 = vmul.f32 %v36, 128.0
    %v293 = vmul.f32 %v37, 128.0
    %v294 = vmul.f32 %v38, 128.0
    %v295 = vmul.f32 %v39, 128.0
    %v296 = vmul.f32 %v40, 128.0
    %v297 = vmul.f32 %v41, 128.0
    %v298 = vmul.f32 %v42, 128.0
    %v299 = vmul.f32 %v43, 128.0
    %v300 = vmul.f32 %v44, 128.0
    %v301 = vmul.f32 %v45, 128.0
    %v302 = vmul.f32 %v46, 128.0
    %v303 = vmul.f32 %v47, 128.0
    %v304 = vmul.f32 %v48, 128.0
    %v305 = vmul.f32 %v49, 128.0
    %v306 = vmul.f32 %v50, 128.0
    %v307 = vmul.f32 %v51, 128.0
    %v308 = vmul.f32 %v52, 128.0
    %v309 = vmul.f32 %v53, 128.0
    %v310 = vmul.f32 %v54, 128.0
    %v311 = vmul.f32 %v55, 128.0
    %v312 = vmul.f32 %v56, 128.0
    %v313 = vmul.f32 %v57, 128.0
    %v314 = vmul.f32 %v58, 128.0
    %v315 = vmul.f32 %v59, 128.0
    %v316 = vmul.f32 %v60, 128.0
    %v317 = vmul.f32 %v61, 128.0
    %v318 = vmul.f32 %v62, 128.0
    %v319 = vmul.f32 %v63, 128.0
    %v320 = vmul.f32 %v64, 128.0
    %v321 = vmul.f32 %v65, 128.0
    %v322 = vmul.f32 %v66, 128.0
    %v323 = vmul.f32 %v67, 128.0
    %v324 = vmul.f32 %v68, 128.0
    %v325 = vmul.f32 %v69, 128.0
    %v326 = vmul.f32 %v70, 128.0
    %v327 = vmul.f32 %v71, 128.0
    %v328 = vmul.f32 %v72, 128.0
    %v329 = vmul.f32 %v73, 128.0
    %v330 = vmul.f32 %v74, 128.0
    %v331 = vmul.f32 %v75, 128.0
    %v332 = vmul.f32 %v76, 128.0
    %v333 = vmul.f32 %v77, 128.0
    %v334 = vmul.f32 %v78, 128.0
    %v335 = vmul.f32 %v79, 128.0
    %v336 = vmul.f32 %v80, 128.0
    %v337 = vmul.f32 %v81, 128.0
    %v338 = vmul.f32 %v82, 128.0
    %v339 = vmul.f32 %v83, 128.0
    %v340 = vmul.f32 %v84, 128.0
    %v341 = vmul.f32 %v85, 128.0
    %v342 = vmul.f32 %v86, 128.0
    %v343 = vmul.f32 %v87, 128.0
    %v344 = vmul.f32 %v88, 128.0
    %v345 = vmul.f32 %v89, 128.0
    %v346 = vmul.f32 %v90, 128.0
    %v347 = vmul.f32 %v91, 128.0
    %v348 = vmul.f32 %v92, 128.0
    %v349 = vmul.f32 %v93, 128.0
    %v350 = vmul.f32 %v94, 128.0
    %v351 = vmul.f32 %v95, 128.0
    %v352 = vmul.f32 %v96, 128.0
    %v353 = vmul.f32 %v97, 128.0
    %v354 = vmul.f32 %v98, 128.0
    %v355 = vmul.f32 %v99, 128.0
    %v356 = vmul.f32 %v100, 128.0
    %v357 = vmul.f32 %v101, 128.0
    %v358 = vmul.f32 %v102, 128.0
    %v359 = vmul.f32 %v103, 128.0
    %v360 = vmul.f32 %v104, 128.0
    %v361 = vmul.f32 %v105, 128.0
    %v362 = vmul.f32 %v106, 128.0
    %v363 = vmul.f32 %v107, 128.0
    %v364 = vmul.f32 %v108, 128.0
    %v365 = vmul.f32 %v109, 128.0
    %v366 = vmul.f32 %v110, 128.0
    %v367 = vmul.f32 %v111, 128.0
    %v368 = vmul.f32 %v112, 128.0
    %v369 = vmul.f32 %v113, 128.0
    %v370 = vmul.f32 %v114, 128.0
    %v371 = vmul.f32 %v115, 128.0
    %v372 = vmul.f32 %v116, 128.0
    %v373 = vmul.f32 %v117, 128.0
    %v374 = vmul.f32 %v118, 128.0
    %v375 = vmul.f32 %v119, 128.0
    %v376 = vmul.f32 %v120, 128.0
    %v377 = vmul.f32 %v121, 128.0
    %v378 = vmul.f32 %v122, 128.0
    %v379 = vmul.f32 %v123, 128.0
    %v380 = vmul.f32 %v124, 128.0
    %v381 = vmul.f32 %v125, 128.0
    %v382 = vmul.f32 %v126, 128.0
    %v383 = vmul.f32 %v127, 128.0
    %v384 = vmul.f32 %v128, 128.0
    %v385 = vmul.f32 %v129, 128.0
    %v386 = vmul.f32 %v130, 128.0
    %v387 = vmul.f32 %v131, 128.0
    %v388 = vmul.f32 %v132, 128.0
    %v389 = vmul.f32 %v133, 128.0
    %v390 = vmul.f32 %v134, 128.0
    %v391 = vmul.f32 %v135, 128.0
    %v392 = vmul.f32 %v136, 128.0
    %v393 = vmul.f32 %v137, 128.0
    %v394 = vmul.f32 %v138, 128.0
    %v395 = vmul.f32 %v139, 128.0
    %v396 = vmul.f32 %v140, 128.0
    %v397 = vmul.f32 %v141, 128.0
    %v398 = vmul.f32 %v142, 128.0
    %v399 = vmul.f32 %v143, 128.0
    %v400 = vmul.f32 %v144, 128.0
    %v401 = vmul.f32 %v145, 128.0
    %v402 = vmul.f32 %v146, 128.0
    %v403 = vmul.f32 %v147, 128.0
    %v404 = vmul.f32 %v148, 128.0
    %v405 = vmul.f32 %v149, 128.0
    %v406 = vmul.f32 %v150, 128.0
    %v407 = vmul.f32 %v151, 128.0
    %v408 = vmul.f32 %v152, 128.0
    %v409 = vmul.f32 %v153, 128.0
    %v410 = vmul.f32 %v154, 128.0
    %v411 = vmul.f32 %v155, 128.0
    %v412 = vmul.f32 %v156, 128.0
    %v413 = vmul.f32 %v157, 128.0
    %v414 = vmul.f32 %v158, 128.0
    %v415 = vmul.f32 %v159, 128.0
    %v416 = vmul.f32 %v160, 128.0
    %v417 = vmul.f32 %v161, 128.0
    %v418 = vmul.f32 %v162, 128.0
    %v419 = vmul.f32 %v163, 128.0
    %v420 = vmul.f32 %v164, 128.0
    %v421 = vmul.f32 %v165, 128.0
    %v422 = vmul.f32 %v166, 128.0
    %v423 = vmul.f32 %v167, 128.0
    %v424 = vmul.f32 %v168, 128.0
    %v425 = vmul.f32 %v169, 128.0
    %v426 = vmul.f32 %v170, 128.0
    %v427 = vmul.f32 %v171, 128.0
    %v428 = vmul.f32 %v172, 128.0
    %v429 = vmul.f32 %v173, 128.0
    %v430 = vmul.f32 %v174, 128.0
    %v431 = vmul.f32 %v175, 128.0
    %v432 = vmul.f32 %v176, 128.0
    %v433 = vmul.f32 %v177, 128.0
    %v434 = vmul.f32 %v178, 128.0
    %v435 = vmul.f32 %v179, 128.0
    %v436 = vmul.f32 %v180, 128.0
    %v437 = vmul.f32 %v181, 128.0
    %v438 = vmul.f32 %v182, 128.0
    %v439 = vmul.f32 %v183, 128.0
    %v440 = vmul.f32 %v184, 128.0
    %v441 = vmul.f32 %v185, 128.0
    %v442 = vmul.f32 %v186, 128.0
    %v443 = vmul.f32 %v187, 128.0
    %v444 = vmul.f32 %v188, 128.0
    %v445 = vmul.f32 %v189, 128.0
    %v446 = vmul.f32 %v190, 128.0
    %v447 = vmul.f32 %v191, 128.0
    %v448 = vmul.f32 %v192, 128.0
    %v449 = vmul.f32 %v193, 128.0
    %v450 = vmul.f32 %v194, 128.0
    %v451 = vmul.f32 %v195, 128.0
    %v452 = vmul.f32 %v196, 128.0
    %v453 = vmul.f32 %v197, 128.0
    %v454 = vmul.f32 %v198, 128.0
    %v455 = vmul.f32 %v199, 128.0
    %v456 = vmul.f32 %v200, 128.0
    %v457 = vmul.f32 %v201, 128.0
    %v458 = vmul.f32 %v202, 128.0
    %v459 = vmul.f32 %v203, 128.0
    %v460 = vmul.f32 %v204, 128.0
    %v461 = vmul.f32 %v205, 128.0
    %v462 = vmul.f32 %v206, 128.0
    %v463 = vmul.f32 %v207, 128.0
    %v464 = vmul.f32 %v208, 128.0
    %v465 = vmul.f32 %v209, 128.0
    %v466 = vmul.f32 %v210, 128.0
    %v467 = vmul.f32 %v211, 128.0
    %v468 = vmul.f32 %v212, 128.0
    %v469 = vmul.f32 %v213, 128.0
    %v470 = vmul.f32 %v214, 128.0
    %v471 = vmul.f32 %v215, 128.0
    %v472 = vmul.f32 %v216, 128.0
    %v473 = vmul.f32 %v217, 128.0
    %v474 = vmul.f32 %v218, 128.0
    %v475 = vmul.f32 %v219, 128.0
    %v476 = vmul.f32 %v220, 128.0
    %v477 = vmul.f32 %v221, 128.0
    %v478 = vmul.f32 %v222, 128.0
    %v479 = vmul.f32 %v223, 128.0
    %v480 = vmul.f32 %v224, 128.0
    %v481 = vmul.f32 %v225, 128.0
    %v482 = vmul.f32 %v226, 128.0
    %v483 = vmul.f32 %v227, 128.0
    %v484 = vmul.f32 %v228, 128.0
    %v485 = vmul.f32 %v229, 128.0
    %v486 = vmul.f32 %v230, 128.0
    %v487 = vmul.f32 %v231, 128.0
    %v488 = vmul.f32 %v232, 128.0
    %v489 = vmul.f32 %v233, 128.0
    %v490 = vmul.f32 %v234, 128.0
    %v491 = vmul.f32 %v235, 128.0
    %v492 = vmul.f32 %v236, 128.0
    %v493 = vmul.f32 %v237, 128.0
    %v494 = vmul.f32 %v238, 128.0
    %v495 = vmul.f32 %v239, 128.0
    %v496 = vmul.f32 %v240, 128.0
    %v497 = vmul.f32 %v241, 128.0
    %v498 = vmul.f32 %v242, 128.0
    %v499 = vmul.f32 %v243, 128.0
    %v500 = vmul.f32 %v244, 128.0
    %v501 = vmul.f32 %v245, 128.0
    %v502 = vmul.f32 %v246, 128.0
    %v503 = vmul.f32 %v247, 128.0
    %v504 = vmul.f32 %v248, 128.0
    %v505 = vmul.f32 %v249, 128.0
    %v506 = vmul.f32 %v250, 128.0
    %v507 = vmul.f32 %v251, 128.0
    %v508 = vmul.f32 %v252, 128.0
    %v509 = vmul.f32 %v253, 128.0
    %v510 = vmul.f32 %v254, 128.0
    %v511 = vmul.f32 %v255, 128.0
    %v512 = vmul.f32 %v256, 128.0
    %v513 = vmul.f32 %v257, 128.0
    %v514 = vmul.f32 %v258, 128.0
    %v515 = vmul.f32 %v259, 128.0
    %v516 = vmul.f32 %v260, 128.0
    %v517 = vmul.f32 %v261, 128.0
    %v518 = vmul.f32 %v262, 128.0
    %v519 = vmul.f32 %v263, 128.0
    %v520 = vmul.f32 %v264, 128.0
    %v521 = vmul.f32 %v265, 128.0
    %v522 = vmul.f32 %v266, 128.0
    %v523 = vmul.f32 %v267, 128.0
    %v524 = vmul.f32 %v268, 128.0
    %v525 = vmul.f32 %v269, 128.0
    %v526 = vmul.f32 %v270, 128.0
    %v527 = vmul.f32 %v271, 128.0
    %v528 = vmul.f32 %v272, 128.0
    %v529 = vmul.f32 %v273, 128.0
    %v530 = vmul.f32 %v274, 128.0
    %v531 = vmul.f32 %v275, 128.0
    %v532 = vmul.f32 %v276, 128.0
    %v533 = vmul.f32 %v277, 128.0
    %v534 = vmul.f32 %v278, 128.0
    %v535 = vround.ne.pseudo %v279
    %v536 = vround.ne.pseudo %v280
    %v537 = vround.ne.pseudo %v281
    %v538 = vround.ne.pseudo %v282
    %v539 = vround.ne.pseudo %v283
    %v540 = vround.ne.pseudo %v284
    %v541 = vround.ne.pseudo %v285
    %v542 = vround.ne.pseudo %v286
    %v543 = vround.ne.pseudo %v287
    %v544 = vround.ne.pseudo %v288
    %v545 = vround.ne.pseudo %v289
    %v546 = vround.ne.pseudo %v290
    %v547 = vround.ne.pseudo %v291
    %v548 = vround.ne.pseudo %v292
    %v549 = vround.ne.pseudo %v293
    %v550 = vround.ne.pseudo %v294
    %v551 = vround.ne.pseudo %v295
    %v552 = vround.ne.pseudo %v296
    %v553 = vround.ne.pseudo %v297
    %v554 = vround.ne.pseudo %v298
    %v555 = vround.ne.pseudo %v299
    %v556 = vround.ne.pseudo %v300
    %v557 = vround.ne.pseudo %v301
    %v558 = vround.ne.pseudo %v302
    %v559 = vround.ne.pseudo %v303
    %v560 = vround.ne.pseudo %v304
    %v561 = vround.ne.pseudo %v305
    %v562 = vround.ne.pseudo %v306
    %v563 = vround.ne.pseudo %v307
    %v564 = vround.ne.pseudo %v308
    %v565 = vround.ne.pseudo %v309
    %v566 = vround.ne.pseudo %v310
    %v567 = vround.ne.pseudo %v311
    %v568 = vround.ne.pseudo %v312
    %v569 = vround.ne.pseudo %v313
    %v570 = vround.ne.pseudo %v314
    %v571 = vround.ne.pseudo %v315
    %v572 = vround.ne.pseudo %v316
    %v573 = vround.ne.pseudo %v317
    %v574 = vround.ne.pseudo %v318
    %v575 = vround.ne.pseudo %v319
    %v576 = vround.ne.pseudo %v320
    %v577 = vround.ne.pseudo %v321
    %v578 = vround.ne.pseudo %v322
    %v579 = vround.ne.pseudo %v323
    %v580 = vround.ne.pseudo %v324
    %v581 = vround.ne.pseudo %v325
    %v582 = vround.ne.pseudo %v326
    %v583 = vround.ne.pseudo %v327
    %v584 = vround.ne.pseudo %v328
    %v585 = vround.ne.pseudo %v329
    %v586 = vround.ne.pseudo %v330
    %v587 = vround.ne.pseudo %v331
    %v588 = vround.ne.pseudo %v332
    %v589 = vround.ne.pseudo %v333
    %v590 = vround.ne.pseudo %v334
    %v591 = vround.ne.pseudo %v335
    %v592 = vround.ne.pseudo %v336
    %v593 = vround.ne.pseudo %v337
    %v594 = vround.ne.pseudo %v338
    %v595 = vround.ne.pseudo %v339
    %v596 = vround.ne.pseudo %v340
    %v597 = vround.ne.pseudo %v341
    %v598 = vround.ne.pseudo %v342
    %v599 = vround.ne.pseudo %v343
    %v600 = vround.ne.pseudo %v344
    %v601 = vround.ne.pseudo %v345
    %v602 = vround.ne.pseudo %v346
    %v603 = vround.ne.pseudo %v347
    %v604 = vround.ne.pseudo %v348
    %v605 = vround.ne.pseudo %v349
    %v606 = vround.ne.pseudo %v350
    %v607 = vround.ne.pseudo %v351
    %v608 = vround.ne.pseudo %v352
    %v609 = vround.ne.pseudo %v353
    %v610 = vround.ne.pseudo %v354
    %v611 = vround.ne.pseudo %v355
    %v612 = vround.ne.pseudo %v356
    %v613 = vround.ne.pseudo %v357
    %v614 = vround.ne.pseudo %v358
    %v615 = vround.ne.pseudo %v359
    %v616 = vround.ne.pseudo %v360
    %v617 = vround.ne.pseudo %v361
    %v618 = vround.ne.pseudo %v362
    %v619 = vround.ne.pseudo %v363
    %v620 = vround.ne.pseudo %v364
    %v621 = vround.ne.pseudo %v365
    %v622 = vround.ne.pseudo %v366
    %v623 = vround.ne.pseudo %v367
    %v624 = vround.ne.pseudo %v368
    %v625 = vround.ne.pseudo %v369
    %v626 = vround.ne.pseudo %v370
    %v627 = vround.ne.pseudo %v371
    %v628 = vround.ne.pseudo %v372
    %v629 = vround.ne.pseudo %v373
    %v630 = vround.ne.pseudo %v374
    %v631 = vround.ne.pseudo %v375
    %v632 = vround.ne.pseudo %v376
    %v633 = vround.ne.pseudo %v377
    %v634 = vround.ne.pseudo %v378
    %v635 = vround.ne.pseudo %v379
    %v636 = vround.ne.pseudo %v380
    %v637 = vround.ne.pseudo %v381
    %v638 = vround.ne.pseudo %v382
    %v639 = vround.ne.pseudo %v383
    %v640 = vround.ne.pseudo %v384
    %v641 = vround.ne.pseudo %v385
    %v642 = vround.ne.pseudo %v386
    %v643 = vround.ne.pseudo %v387
    %v644 = vround.ne.pseudo %v388
    %v645 = vround.ne.pseudo %v389
    %v646 = vround.ne.pseudo %v390
    %v647 = vround.ne.pseudo %v391
    %v648 = vround.ne.pseudo %v392
    %v649 = vround.ne.pseudo %v393
    %v650 = vround.ne.pseudo %v394
    %v651 = vround.ne.pseudo %v395
    %v652 = vround.ne.pseudo %v396
    %v653 = vround.ne.pseudo %v397
    %v654 = vround.ne.pseudo %v398
    %v655 = vround.ne.pseudo %v399
    %v656 = vround.ne.pseudo %v400
    %v657 = vround.ne.pseudo %v401
    %v658 = vround.ne.pseudo %v402
    %v659 = vround.ne.pseudo %v403
    %v660 = vround.ne.pseudo %v404
    %v661 = vround.ne.pseudo %v405
    %v662 = vround.ne.pseudo %v406
    %v663 = vround.ne.pseudo %v407
    %v664 = vround.ne.pseudo %v408
    %v665 = vround.ne.pseudo %v409
    %v666 = vround.ne.pseudo %v410
    %v667 = vround.ne.pseudo %v411
    %v668 = vround.ne.pseudo %v412
    %v669 = vround.ne.pseudo %v413
    %v670 = vround.ne.pseudo %v414
    %v671 = vround.ne.pseudo %v415
    %v672 = vround.ne.pseudo %v416
    %v673 = vround.ne.pseudo %v417
    %v674 = vround.ne.pseudo %v418
    %v675 = vround.ne.pseudo %v419
    %v676 = vround.ne.pseudo %v420
    %v677 = vround.ne.pseudo %v421
    %v678 = vround.ne.pseudo %v422
    %v679 = vround.ne.pseudo %v423
    %v680 = vround.ne.pseudo %v424
    %v681 = vround.ne.pseudo %v425
    %v682 = vround.ne.pseudo %v426
    %v683 = vround.ne.pseudo %v427
    %v684 = vround.ne.pseudo %v428
    %v685 = vround.ne.pseudo %v429
    %v686 = vround.ne.pseudo %v430
    %v687 = vround.ne.pseudo %v431
    %v688 = vround.ne.pseudo %v432
    %v689 = vround.ne.pseudo %v433
    %v690 = vround.ne.pseudo %v434
    %v691 = vround.ne.pseudo %v435
    %v692 = vround.ne.pseudo %v436
    %v693 = vround.ne.pseudo %v437
    %v694 = vround.ne.pseudo %v438
    %v695 = vround.ne.pseudo %v439
    %v696 = vround.ne.pseudo %v440
    %v697 = vround.ne.pseudo %v441
    %v698 = vround.ne.pseudo %v442
    %v699 = vround.ne.pseudo %v443
    %v700 = vround.ne.pseudo %v444
    %v701 = vround.ne.pseudo %v445
    %v702 = vround.ne.pseudo %v446
    %v703 = vround.ne.pseudo %v447
    %v704 = vround.ne.pseudo %v448
    %v705 = vround.ne.pseudo %v449
    %v706 = vround.ne.pseudo %v450
    %v707 = vround.ne.pseudo %v451
    %v708 = vround.ne.pseudo %v452
    %v709 = vround.ne.pseudo %v453
    %v710 = vround.ne.pseudo %v454
    %v711 = vround.ne.pseudo %v455
    %v712 = vround.ne.pseudo %v456
    %v713 = vround.ne.pseudo %v457
    %v714 = vround.ne.pseudo %v458
    %v715 = vround.ne.pseudo %v459
    %v716 = vround.ne.pseudo %v460
    %v717 = vround.ne.pseudo %v461
    %v718 = vround.ne.pseudo %v462
    %v719 = vround.ne.pseudo %v463
    %v720 = vround.ne.pseudo %v464
    %v721 = vround.ne.pseudo %v465
    %v722 = vround.ne.pseudo %v466
    %v723 = vround.ne.pseudo %v467
    %v724 = vround.ne.pseudo %v468
    %v725 = vround.ne.pseudo %v469
    %v726 = vround.ne.pseudo %v470
    %v727 = vround.ne.pseudo %v471
    %v728 = vround.ne.pseudo %v472
    %v729 = vround.ne.pseudo %v473
    %v730 = vround.ne.pseudo %v474
    %v731 = vround.ne.pseudo %v475
    %v732 = vround.ne.pseudo %v476
    %v733 = vround.ne.pseudo %v477
    %v734 = vround.ne.pseudo %v478
    %v735 = vround.ne.pseudo %v479
    %v736 = vround.ne.pseudo %v480
    %v737 = vround.ne.pseudo %v481
    %v738 = vround.ne.pseudo %v482
    %v739 = vround.ne.pseudo %v483
    %v740 = vround.ne.pseudo %v484
    %v741 = vround.ne.pseudo %v485
    %v742 = vround.ne.pseudo %v486
    %v743 = vround.ne.pseudo %v487
    %v744 = vround.ne.pseudo %v488
    %v745 = vround.ne.pseudo %v489
    %v746 = vround.ne.pseudo %v490
    %v747 = vround.ne.pseudo %v491
    %v748 = vround.ne.pseudo %v492
    %v749 = vround.ne.pseudo %v493
    %v750 = vround.ne.pseudo %v494
    %v751 = vround.ne.pseudo %v495
    %v752 = vround.ne.pseudo %v496
    %v753 = vround.ne.pseudo %v497
    %v754 = vround.ne.pseudo %v498
    %v755 = vround.ne.pseudo %v499
    %v756 = vround.ne.pseudo %v500
    %v757 = vround.ne.pseudo %v501
    %v758 = vround.ne.pseudo %v502
    %v759 = vround.ne.pseudo %v503
    %v760 = vround.ne.pseudo %v504
    %v761 = vround.ne.pseudo %v505
    %v762 = vround.ne.pseudo %v506
    %v763 = vround.ne.pseudo %v507
    %v764 = vround.ne.pseudo %v508
    %v765 = vround.ne.pseudo %v509
    %v766 = vround.ne.pseudo %v510
    %v767 = vround.ne.pseudo %v511
    %v768 = vround.ne.pseudo %v512
    %v769 = vround.ne.pseudo %v513
    %v770 = vround.ne.pseudo %v514
    %v771 = vround.ne.pseudo %v515
    %v772 = vround.ne.pseudo %v516
    %v773 = vround.ne.pseudo %v517
    %v774 = vround.ne.pseudo %v518
    %v775 = vround.ne.pseudo %v519
    %v776 = vround.ne.pseudo %v520
    %v777 = vround.ne.pseudo %v521
    %v778 = vround.ne.pseudo %v522
    %v779 = vround.ne.pseudo %v523
    %v780 = vround.ne.pseudo %v524
    %v781 = vround.ne.pseudo %v525
    %v782 = vround.ne.pseudo %v526
    %v783 = vround.ne.pseudo %v527
    %v784 = vround.ne.pseudo %v528
    %v785 = vround.ne.pseudo %v529
    %v786 = vround.ne.pseudo %v530
    %v787 = vround.ne.pseudo %v531
    %v788 = vround.ne.pseudo %v532
    %v789 = vround.ne.pseudo %v533
    %v790 = vround.ne.pseudo %v534
    %v791 = vmul.f32 %v535, 0.0078125
    %v792 = vmul.f32 %v536, 0.0078125
    %v793 = vmul.f32 %v537, 0.0078125
    %v794 = vmul.f32 %v538, 0.0078125
    %v795 = vmul.f32 %v539, 0.0078125
    %v796 = vmul.f32 %v540, 0.0078125
    %v797 = vmul.f32 %v541, 0.0078125
    %v798 = vmul.f32 %v542, 0.0078125
    %v799 = vmul.f32 %v543, 0.0078125
    %v800 = vmul.f32 %v544, 0.0078125
    %v801 = vmul.f32 %v545, 0.0078125
    %v802 = vmul.f32 %v546, 0.0078125
    %v803 = vmul.f32 %v547, 0.0078125
    %v804 = vmul.f32 %v548, 0.0078125
    %v805 = vmul.f32 %v549, 0.0078125
    %v806 = vmul.f32 %v550, 0.0078125
    %v807 = vmul.f32 %v551, 0.0078125
    %v808 = vmul.f32 %v552, 0.0078125
    %v809 = vmul.f32 %v553, 0.0078125
    %v810 = vmul.f32 %v554, 0.0078125
    %v811 = vmul.f32 %v555, 0.0078125
    %v812 = vmul.f32 %v556, 0.0078125
    %v813 = vmul.f32 %v557, 0.0078125
    %v814 = vmul.f32 %v558, 0.0078125
    %v815 = vmul.f32 %v559, 0.0078125
    %v816 = vmul.f32 %v560, 0.0078125
    %v817 = vmul.f32 %v561, 0.0078125
    %v818 = vmul.f32 %v562, 0.0078125
    %v819 = vmul.f32 %v563, 0.0078125
    %v820 = vmul.f32 %v564, 0.0078125
    %v821 = vmul.f32 %v565, 0.0078125
    %v822 = vmul.f32 %v566, 0.0078125
    %v823 = vmul.f32 %v567, 0.0078125
    %v824 = vmul.f32 %v568, 0.0078125
    %v825 = vmul.f32 %v569, 0.0078125
    %v826 = vmul.f32 %v570, 0.0078125
    %v827 = vmul.f32 %v571, 0.0078125
    %v828 = vmul.f32 %v572, 0.0078125
    %v829 = vmul.f32 %v573, 0.0078125
    %v830 = vmul.f32 %v574, 0.0078125
    %v831 = vmul.f32 %v575, 0.0078125
    %v832 = vmul.f32 %v576, 0.0078125
    %v833 = vmul.f32 %v577, 0.0078125
    %v834 = vmul.f32 %v578, 0.0078125
    %v835 = vmul.f32 %v579, 0.0078125
    %v836 = vmul.f32 %v580, 0.0078125
    %v837 = vmul.f32 %v581, 0.0078125
    %v838 = vmul.f32 %v582, 0.0078125
    %v839 = vmul.f32 %v583, 0.0078125
    %v840 = vmul.f32 %v584, 0.0078125
    %v841 = vmul.f32 %v585, 0.0078125
    %v842 = vmul.f32 %v586, 0.0078125
    %v843 = vmul.f32 %v587, 0.0078125
    %v844 = vmul.f32 %v588, 0.0078125
    %v845 = vmul.f32 %v589, 0.0078125
    %v846 = vmul.f32 %v590, 0.0078125
    %v847 = vmul.f32 %v591, 0.0078125
    %v848 = vmul.f32 %v592, 0.0078125
    %v849 = vmul.f32 %v593, 0.0078125
    %v850 = vmul.f32 %v594, 0.0078125
    %v851 = vmul.f32 %v595, 0.0078125
    %v852 = vmul.f32 %v596, 0.0078125
    %v853 = vmul.f32 %v597, 0.0078125
    %v854 = vmul.f32 %v598, 0.0078125
    %v855 = vmul.f32 %v599, 0.0078125
    %v856 = vmul.f32 %v600, 0.0078125
    %v857 = vmul.f32 %v601, 0.0078125
    %v858 = vmul.f32 %v602, 0.0078125
    %v859 = vmul.f32 %v603, 0.0078125
    %v860 = vmul.f32 %v604, 0.0078125
    %v861 = vmul.f32 %v605, 0.0078125
    %v862 = vmul.f32 %v606, 0.0078125
    %v863 = vmul.f32 %v607, 0.0078125
    %v864 = vmul.f32 %v608, 0.0078125
    %v865 = vmul.f32 %v609, 0.0078125
    %v866 = vmul.f32 %v610, 0.0078125
    %v867 = vmul.f32 %v611, 0.0078125
    %v868 = vmul.f32 %v612, 0.0078125
    %v869 = vmul.f32 %v613, 0.0078125
    %v870 = vmul.f32 %v614, 0.0078125
    %v871 = vmul.f32 %v615, 0.0078125
    %v872 = vmul.f32 %v616, 0.0078125
    %v873 = vmul.f32 %v617, 0.0078125
    %v874 = vmul.f32 %v618, 0.0078125
    %v875 = vmul.f32 %v619, 0.0078125
    %v876 = vmul.f32 %v620, 0.0078125
    %v877 = vmul.f32 %v621, 0.0078125
    %v878 = vmul.f32 %v622, 0.0078125
    %v879 = vmul.f32 %v623, 0.0078125
    %v880 = vmul.f32 %v624, 0.0078125
    %v881 = vmul.f32 %v625, 0.0078125
    %v882 = vmul.f32 %v626, 0.0078125
    %v883 = vmul.f32 %v627, 0.0078125
    %v884 = vmul.f32 %v628, 0.0078125
    %v885 = vmul.f32 %v629, 0.0078125
    %v886 = vmul.f32 %v630, 0.0078125
    %v887 = vmul.f32 %v631, 0.0078125
    %v888 = vmul.f32 %v632, 0.0078125
    %v889 = vmul.f32 %v633, 0.0078125
    %v890 = vmul.f32 %v634, 0.0078125
    %v891 = vmul.f32 %v635, 0.0078125
    %v892 = vmul.f32 %v636, 0.0078125
    %v893 = vmul.f32 %v637, 0.0078125
    %v894 = vmul.f32 %v638, 0.0078125
    %v895 = vmul.f32 %v639, 0.0078125
    %v896 = vmul.f32 %v640, 0.0078125
    %v897 = vmul.f32 %v641, 0.0078125
    %v898 = vmul.f32 %v642, 0.0078125
    %v899 = vmul.f32 %v643, 0.0078125
    %v900 = vmul.f32 %v644, 0.0078125
    %v901 = vmul.f32 %v645, 0.0078125
    %v902 = vmul.f32 %v646, 0.0078125
    %v903 = vmul.f32 %v647, 0.0078125
    %v904 = vmul.f32 %v648, 0.0078125
    %v905 = vmul.f32 %v649, 0.0078125
    %v906 = vmul.f32 %v650, 0.0078125
    %v907 = vmul.f32 %v651, 0.0078125
    %v908 = vmul.f32 %v652, 0.0078125
    %v909 = vmul.f32 %v653, 0.0078125
    %v910 = vmul.f32 %v654, 0.0078125
    %v911 = vmul.f32 %v655, 0.0078125
    %v912 = vmul.f32 %v656, 0.0078125
    %v913 = vmul.f32 %v657, 0.0078125
    %v914 = vmul.f32 %v658, 0.0078125
    %v915 = vmul.f32 %v659, 0.0078125
    %v916 = vmul.f32 %v660, 0.0078125
    %v917 = vmul.f32 %v661, 0.0078125
    %v918 = vmul.f32 %v662, 0.0078125
    %v919 = vmul.f32 %v663, 0.0078125
    %v920 = vmul.f32 %v664, 0.0078125
    %v921 = vmul.f32 %v665, 0.0078125
    %v922 = vmul.f32 %v666, 0.0078125
    %v923 = vmul.f32 %v667, 0.0078125
    %v924 = vmul.f32 %v668, 0.0078125
    %v925 = vmul.f32 %v669, 0.0078125
    %v926 = vmul.f32 %v670, 0.0078125
    %v927 = vmul.f32 %v671, 0.0078125
    %v928 = vmul.f32 %v672, 0.0078125
    %v929 = vmul.f32 %v673, 0.0078125
    %v930 = vmul.f32 %v674, 0.0078125
    %v931 = vmul.f32 %v675, 0.0078125
    %v932 = vmul.f32 %v676, 0.0078125
    %v933 = vmul.f32 %v677, 0.0078125
    %v934 = vmul.f32 %v678, 0.0078125
    %v935 = vmul.f32 %v679, 0.0078125
    %v936 = vmul.f32 %v680, 0.0078125
    %v937 = vmul.f32 %v681, 0.0078125
    %v938 = vmul.f32 %v682, 0.0078125
    %v939 = vmul.f32 %v683, 0.0078125
    %v940 = vmul.f32 %v684, 0.0078125
    %v941 = vmul.f32 %v685, 0.0078125
    %v942 = vmul.f32 %v686, 0.0078125
    %v943 = vmul.f32 %v687, 0.0078125
    %v944 = vmul.f32 %v688, 0.0078125
    %v945 = vmul.f32 %v689, 0.0078125
    %v946 = vmul.f32 %v690, 0.0078125
    %v947 = vmul.f32 %v691, 0.0078125
    %v948 = vmul.f32 %v692, 0.0078125
    %v949 = vmul.f32 %v693, 0.0078125
    %v950 = vmul.f32 %v694, 0.0078125
    %v951 = vmul.f32 %v695, 0.0078125
    %v952 = vmul.f32 %v696, 0.0078125
    %v953 = vmul.f32 %v697, 0.0078125
    %v954 = vmul.f32 %v698, 0.0078125
    %v955 = vmul.f32 %v699, 0.0078125
    %v956 = vmul.f32 %v700, 0.0078125
    %v957 = vmul.f32 %v701, 0.0078125
    %v958 = vmul.f32 %v702, 0.0078125
    %v959 = vmul.f32 %v703, 0.0078125
    %v960 = vmul.f32 %v704, 0.0078125
    %v961 = vmul.f32 %v705, 0.0078125
    %v962 = vmul.f32 %v706, 0.0078125
    %v963 = vmul.f32 %v707, 0.0078125
    %v964 = vmul.f32 %v708, 0.0078125
    %v965 = vmul.f32 %v709, 0.0078125
    %v966 = vmul.f32 %v710, 0.0078125
    %v967 = vmul.f32 %v711, 0.0078125
    %v968 = vmul.f32 %v712, 0.0078125
    %v969 = vmul.f32 %v713, 0.0078125
    %v970 = vmul.f32 %v714, 0.0078125
    %v971 = vmul.f32 %v715, 0.0078125
    %v972 = vmul.f32 %v716, 0.0078125
    %v973 = vmul.f32 %v717, 0.0078125
    %v974 = vmul.f32 %v718, 0.0078125
    %v975 = vmul.f32 %v719, 0.0078125
    %v976 = vmul.f32 %v720, 0.0078125
    %v977 = vmul.f32 %v721, 0.0078125
    %v978 = vmul.f32 %v722, 0.0078125
    %v979 = vmul.f32 %v723, 0.0078125
    %v980 = vmul.f32 %v724, 0.0078125
    %v981 = vmul.f32 %v725, 0.0078125
    %v982 = vmul.f32 %v726, 0.0078125
    %v983 = vmul.f32 %v727, 0.0078125
    %v984 = vmul.f32 %v728, 0.0078125
    %v985 = vmul.f32 %v729, 0.0078125
    %v986 = vmul.f32 %v730, 0.0078125
    %v987 = vmul.f32 %v731, 0.0078125
    %v988 = vmul.f32 %v732, 0.0078125
    %v989 = vmul.f32 %v733, 0.0078125
    %v990 = vmul.f32 %v734, 0.0078125
    %v991 = vmul.f32 %v735, 0.0078125
    %v992 = vmul.f32 %v736, 0.0078125
    %v993 = vmul.f32 %v737, 0.0078125
    %v994 = vmul.f32 %v738, 0.0078125
    %v995 = vmul.f32 %v739, 0.0078125
    %v996 = vmul.f32 %v740, 0.0078125
    %v997 = vmul.f32 %v741, 0.0078125
    %v998 = vmul.f32 %v742, 0.0078125
    %v999 = vmul.f32 %v743, 0.0078125
    %v1000 = vmul.f32 %v744, 0.0078125
    %v1001 = vmul.f32 %v745, 0.0078125
    %v1002 = vmul.f32 %v746, 0.0078125
    %v1003 = vmul.f32 %v747, 0.0078125
    %v1004 = vmul.f32 %v748, 0.0078125
    %v1005 = vmul.f32 %v749, 0.0078125
    %v1006 = vmul.f32 %v750, 0.0078125
    %v1007 = vmul.f32 %v751, 0.0078125
    %v1008 = vmul.f32 %v752, 0.0078125
    %v1009 = vmul.f32 %v753, 0.0078125
    %v1010 = vmul.f32 %v754, 0.0078125
    %v1011 = vmul.f32 %v755, 0.0078125
    %v1012 = vmul.f32 %v756, 0.0078125
    %v1013 = vmul.f32 %v757, 0.0078125
    %v1014 = vmul.f32 %v758, 0.0078125
    %v1015 = vmul.f32 %v759, 0.0078125
    %v1016 = vmul.f32 %v760, 0.0078125
    %v1017 = vmul.f32 %v761, 0.0078125
    %v1018 = vmul.f32 %v762, 0.0078125
    %v1019 = vmul.f32 %v763, 0.0078125
    %v1020 = vmul.f32 %v764, 0.0078125
    %v1021 = vmul.f32 %v765, 0.0078125
    %v1022 = vmul.f32 %v766, 0.0078125
    %v1023 = vmul.f32 %v767, 0.0078125
    %v1024 = vmul.f32 %v768, 0.0078125
    %v1025 = vmul.f32 %v769, 0.0078125
    %v1026 = vmul.f32 %v770, 0.0078125
    %v1027 = vmul.f32 %v771, 0.0078125
    %v1028 = vmul.f32 %v772, 0.0078125
    %v1029 = vmul.f32 %v773, 0.0078125
    %v1030 = vmul.f32 %v774, 0.0078125
    %v1031 = vmul.f32 %v775, 0.0078125
    %v1032 = vmul.f32 %v776, 0.0078125
    %v1033 = vmul.f32 %v777, 0.0078125
    %v1034 = vmul.f32 %v778, 0.0078125
    %v1035 = vmul.f32 %v779, 0.0078125
    %v1036 = vmul.f32 %v780, 0.0078125
    %v1037 = vmul.f32 %v781, 0.0078125
    %v1038 = vmul.f32 %v782, 0.0078125
    %v1039 = vmul.f32 %v783, 0.0078125
    %v1040 = vmul.f32 %v784, 0.0078125
    %v1041 = vmul.f32 %v785, 0.0078125
    %v1042 = vmul.f32 %v786, 0.0078125
    %v1043 = vmul.f32 %v787, 0.0078125
    %v1044 = vmul.f32 %v788, 0.0078125
    %v1045 = vmul.f32 %v789, 0.0078125
    %v1046 = vmul.f32 %v790, 0.0078125
    %1047 = vst [vmem:[#allocation5] sm:$0xff] %v791
    %1048 = vst [vmem:[#allocation5 + $0x8] sm:$0xff] %v792
    %1049 = vst [vmem:[#allocation5 + $0x10] sm:$0xff] %v793
    %1050 = vst [vmem:[#allocation5 + $0x18] sm:$0xff] %v794
    %1051 = vst [vmem:[#allocation5 + $0x20] sm:$0xff] %v795
    %1052 = vst [vmem:[#allocation5 + $0x28] sm:$0xff] %v796
    %1053 = vst [vmem:[#allocation5 + $0x30] sm:$0xff] %v797
    %1054 = vst [vmem:[#allocation5 + $0x38] sm:$0xff] %v798
    %1055 = vst [vmem:[#allocation5 + $0x40] sm:$0xff] %v799
    %1056 = vst [vmem:[#allocation5 + $0x48] sm:$0xff] %v800
    %1057 = vst [vmem:[#allocation5 + $0x50] sm:$0xff] %v801
    %1058 = vst [vmem:[#allocation5 + $0x58] sm:$0xff] %v802
    %1059 = vst [vmem:[#allocation5 + $0x60] sm:$0xff] %v803
    %1060 = vst [vmem:[#allocation5 + $0x68] sm:$0xff] %v804
    %1061 = vst [vmem:[#allocation5 + $0x70] sm:$0xff] %v805
    %1062 = vst [vmem:[#allocation5 + $0x78] sm:$0xff] %v806
    %1063 = vst [vmem:[#allocation5 + $0x80] sm:$0xff] %v807
    %1064 = vst [vmem:[#allocation5 + $0x88] sm:$0xff] %v808
    %1065 = vst [vmem:[#allocation5 + $0x90] sm:$0xff] %v809
    %1066 = vst [vmem:[#allocation5 + $0x98] sm:$0xff] %v810
    %1067 = vst [vmem:[#allocation5 + $0xa0] sm:$0xff] %v811
    %1068 = vst [vmem:[#allocation5 + $0xa8] sm:$0xff] %v812
    %1069 = vst [vmem:[#allocation5 + $0xb0] sm:$0xff] %v813
    %1070 = vst [vmem:[#allocation5 + $0xb8] sm:$0xff] %v814
    %1071 = vst [vmem:[#allocation5 + $0xc0] sm:$0xff] %v815
    %1072 = vst [vmem:[#allocation5 + $0xc8] sm:$0xff] %v816
    %1073 = vst [vmem:[#allocation5 + $0xd0] sm:$0xff] %v817
    %1074 = vst [vmem:[#allocation5 + $0xd8] sm:$0xff] %v818
    %1075 = vst [vmem:[#allocation5 + $0xe0] sm:$0xff] %v819
    %1076 = vst [vmem:[#allocation5 + $0xe8] sm:$0xff] %v820
    %1077 = vst [vmem:[#allocation5 + $0xf0] sm:$0xff] %v821
    %1078 = vst [vmem:[#allocation5 + $0xf8] sm:$0xff] %v822
    %1079 = vst [vmem:[#allocation5 + $0x100] sm:$0xff] %v823
    %1080 = vst [vmem:[#allocation5 + $0x108] sm:$0xff] %v824
    %1081 = vst [vmem:[#allocation5 + $0x110] sm:$0xff] %v825
    %1082 = vst [vmem:[#allocation5 + $0x118] sm:$0xff] %v826
    %1083 = vst [vmem:[#allocation5 + $0x120] sm:$0xff] %v827
    %1084 = vst [vmem:[#allocation5 + $0x128] sm:$0xff] %v828
    %1085 = vst [vmem:[#allocation5 + $0x130] sm:$0xff] %v829
    %1086 = vst [vmem:[#allocation5 + $0x138] sm:$0xff] %v830
    %1087 = vst [vmem:[#allocation5 + $0x140] sm:$0xff] %v831
    %1088 = vst [vmem:[#allocation5 + $0x148] sm:$0xff] %v832
    %1089 = vst [vmem:[#allocation5 + $0x150] sm:$0xff] %v833
    %1090 = vst [vmem:[#allocation5 + $0x158] sm:$0xff] %v834
    %1091 = vst [vmem:[#allocation5 + $0x160] sm:$0xff] %v835
    %1092 = vst [vmem:[#allocation5 + $0x168] sm:$0xff] %v836
    %1093 = vst [vmem:[#allocation5 + $0x170] sm:$0xff] %v837
    %1094 = vst [vmem:[#allocation5 + $0x178] sm:$0xff] %v838
    %1095 = vst [vmem:[#allocation5 + $0x180] sm:$0xff] %v839
    %1096 = vst [vmem:[#allocation5 + $0x188] sm:$0xff] %v840
    %1097 = vst [vmem:[#allocation5 + $0x190] sm:$0xff] %v841
    %1098 = vst [vmem:[#allocation5 + $0x198] sm:$0xff] %v842
    %1099 = vst [vmem:[#allocation5 + $0x1a0] sm:$0xff] %v843
    %1100 = vst [vmem:[#allocation5 + $0x1a8] sm:$0xff] %v844
    %1101 = vst [vmem:[#allocation5 + $0x1b0] sm:$0xff] %v845
    %1102 = vst [vmem:[#allocation5 + $0x1b8] sm:$0xff] %v846
    %1103 = vst [vmem:[#allocation5 + $0x1c0] sm:$0xff] %v847
    %1104 = vst [vmem:[#allocation5 + $0x1c8] sm:$0xff] %v848
    %1105 = vst [vmem:[#allocation5 + $0x1d0] sm:$0xff] %v849
    %1106 = vst [vmem:[#allocation5 + $0x1d8] sm:$0xff] %v850
    %1107 = vst [vmem:[#allocation5 + $0x1e0] sm:$0xff] %v851
    %1108 = vst [vmem:[#allocation5 + $0x1e8] sm:$0xff] %v852
    %1109 = vst [vmem:[#allocation5 + $0x1f0] sm:$0xff] %v853
    %1110 = vst [vmem:[#allocation5 + $0x1f8] sm:$0xff] %v854
    %1111 = vst [vmem:[#allocation5 + $0x200] sm:$0xff] %v855
    %1112 = vst [vmem:[#allocation5 + $0x208] sm:$0xff] %v856
    %1113 = vst [vmem:[#allocation5 + $0x210] sm:$0xff] %v857
    %1114 = vst [vmem:[#allocation5 + $0x218] sm:$0xff] %v858
    %1115 = vst [vmem:[#allocation5 + $0x220] sm:$0xff] %v859
    %1116 = vst [vmem:[#allocation5 + $0x228] sm:$0xff] %v860
    %1117 = vst [vmem:[#allocation5 + $0x230] sm:$0xff] %v861
    %1118 = vst [vmem:[#allocation5 + $0x238] sm:$0xff] %v862
    %1119 = vst [vmem:[#allocation5 + $0x240] sm:$0xff] %v863
    %1120 = vst [vmem:[#allocation5 + $0x248] sm:$0xff] %v864
    %1121 = vst [vmem:[#allocation5 + $0x250] sm:$0xff] %v865
    %1122 = vst [vmem:[#allocation5 + $0x258] sm:$0xff] %v866
    %1123 = vst [vmem:[#allocation5 + $0x260] sm:$0xff] %v867
    %1124 = vst [vmem:[#allocation5 + $0x268] sm:$0xff] %v868
    %1125 = vst [vmem:[#allocation5 + $0x270] sm:$0xff] %v869
    %1126 = vst [vmem:[#allocation5 + $0x278] sm:$0xff] %v870
    %1127 = vst [vmem:[#allocation5 + $0x280] sm:$0xff] %v871
    %1128 = vst [vmem:[#allocation5 + $0x288] sm:$0xff] %v872
    %1129 = vst [vmem:[#allocation5 + $0x290] sm:$0xff] %v873
    %1130 = vst [vmem:[#allocation5 + $0x298] sm:$0xff] %v874
    %1131 = vst [vmem:[#allocation5 + $0x2a0] sm:$0xff] %v875
    %1132 = vst [vmem:[#allocation5 + $0x2a8] sm:$0xff] %v876
    %1133 = vst [vmem:[#allocation5 + $0x2b0] sm:$0xff] %v877
    %1134 = vst [vmem:[#allocation5 + $0x2b8] sm:$0xff] %v878
    %1135 = vst [vmem:[#allocation5 + $0x2c0] sm:$0xff] %v879
    %1136 = vst [vmem:[#allocation5 + $0x2c8] sm:$0xff] %v880
    %1137 = vst [vmem:[#allocation5 + $0x2d0] sm:$0xff] %v881
    %1138 = vst [vmem:[#allocation5 + $0x2d8] sm:$0xff] %v882
    %1139 = vst [vmem:[#allocation5 + $0x2e0] sm:$0xff] %v883
    %1140 = vst [vmem:[#allocation5 + $0x2e8] sm:$0xff] %v884
    %1141 = vst [vmem:[#allocation5 + $0x2f0] sm:$0xff] %v885
    %1142 = vst [vmem:[#allocation5 + $0x2f8] sm:$0xff] %v886
    %1143 = vst [vmem:[#allocation5 + $0x300] sm:$0xff] %v887
    %1144 = vst [vmem:[#allocation5 + $0x308] sm:$0xff] %v888
    %1145 = vst [vmem:[#allocation5 + $0x310] sm:$0xff] %v889
    %1146 = vst [vmem:[#allocation5 + $0x318] sm:$0xff] %v890
    %1147 = vst [vmem:[#allocation5 + $0x320] sm:$0xff] %v891
    %1148 = vst [vmem:[#allocation5 + $0x328] sm:$0xff] %v892
    %1149 = vst [vmem:[#allocation5 + $0x330] sm:$0xff] %v893
    %1150 = vst [vmem:[#allocation5 + $0x338] sm:$0xff] %v894
    %1151 = vst [vmem:[#allocation5 + $0x340] sm:$0xff] %v895
    %1152 = vst [vmem:[#allocation5 + $0x348] sm:$0xff] %v896
    %1153 = vst [vmem:[#allocation5 + $0x350] sm:$0xff] %v897
    %1154 = vst [vmem:[#allocation5 + $0x358] sm:$0xff] %v898
    %1155 = vst [vmem:[#allocation5 + $0x360] sm:$0xff] %v899
    %1156 = vst [vmem:[#allocation5 + $0x368] sm:$0xff] %v900
    %1157 = vst [vmem:[#allocation5 + $0x370] sm:$0xff] %v901
    %1158 = vst [vmem:[#allocation5 + $0x378] sm:$0xff] %v902
    %1159 = vst [vmem:[#allocation5 + $0x380] sm:$0xff] %v903
    %1160 = vst [vmem:[#allocation5 + $0x388] sm:$0xff] %v904
    %1161 = vst [vmem:[#allocation5 + $0x390] sm:$0xff] %v905
    %1162 = vst [vmem:[#allocation5 + $0x398] sm:$0xff] %v906
    %1163 = vst [vmem:[#allocation5 + $0x3a0] sm:$0xff] %v907
    %1164 = vst [vmem:[#allocation5 + $0x3a8] sm:$0xff] %v908
    %1165 = vst [vmem:[#allocation5 + $0x3b0] sm:$0xff] %v909
    %1166 = vst [vmem:[#allocation5 + $0x3b8] sm:$0xff] %v910
    %1167 = vst [vmem:[#allocation5 + $0x3c0] sm:$0xff] %v911
    %1168 = vst [vmem:[#allocation5 + $0x3c8] sm:$0xff] %v912
    %1169 = vst [vmem:[#allocation5 + $0x3d0] sm:$0xff] %v913
    %1170 = vst [vmem:[#allocation5 + $0x3d8] sm:$0xff] %v914
    %1171 = vst [vmem:[#allocation5 + $0x3e0] sm:$0xff] %v915
    %1172 = vst [vmem:[#allocation5 + $0x3e8] sm:$0xff] %v916
    %1173 = vst [vmem:[#allocation5 + $0x3f0] sm:$0xff] %v917
    %1174 = vst [vmem:[#allocation5 + $0x3f8] sm:$0xff] %v918
    %1175 = vst [vmem:[#allocation5 + $0x400] sm:$0xff] %v919
    %1176 = vst [vmem:[#allocation5 + $0x408] sm:$0xff] %v920
    %1177 = vst [vmem:[#allocation5 + $0x410] sm:$0xff] %v921
    %1178 = vst [vmem:[#allocation5 + $0x418] sm:$0xff] %v922
    %1179 = vst [vmem:[#allocation5 + $0x420] sm:$0xff] %v923
    %1180 = vst [vmem:[#allocation5 + $0x428] sm:$0xff] %v924
    %1181 = vst [vmem:[#allocation5 + $0x430] sm:$0xff] %v925
    %1182 = vst [vmem:[#allocation5 + $0x438] sm:$0xff] %v926
    %1183 = vst [vmem:[#allocation5 + $0x440] sm:$0xff] %v927
    %1184 = vst [vmem:[#allocation5 + $0x448] sm:$0xff] %v928
    %1185 = vst [vmem:[#allocation5 + $0x450] sm:$0xff] %v929
    %1186 = vst [vmem:[#allocation5 + $0x458] sm:$0xff] %v930
    %1187 = vst [vmem:[#allocation5 + $0x460] sm:$0xff] %v931
    %1188 = vst [vmem:[#allocation5 + $0x468] sm:$0xff] %v932
    %1189 = vst [vmem:[#allocation5 + $0x470] sm:$0xff] %v933
    %1190 = vst [vmem:[#allocation5 + $0x478] sm:$0xff] %v934
    %1191 = vst [vmem:[#allocation5 + $0x480] sm:$0xff] %v935
    %1192 = vst [vmem:[#allocation5 + $0x488] sm:$0xff] %v936
    %1193 = vst [vmem:[#allocation5 + $0x490] sm:$0xff] %v937
    %1194 = vst [vmem:[#allocation5 + $0x498] sm:$0xff] %v938
    %1195 = vst [vmem:[#allocation5 + $0x4a0] sm:$0xff] %v939
    %1196 = vst [vmem:[#allocation5 + $0x4a8] sm:$0xff] %v940
    %1197 = vst [vmem:[#allocation5 + $0x4b0] sm:$0xff] %v941
    %1198 = vst [vmem:[#allocation5 + $0x4b8] sm:$0xff] %v942
    %1199 = vst [vmem:[#allocation5 + $0x4c0] sm:$0xff] %v943
    %1200 = vst [vmem:[#allocation5 + $0x4c8] sm:$0xff] %v944
    %1201 = vst [vmem:[#allocation5 + $0x4d0] sm:$0xff] %v945
    %1202 = vst [vmem:[#allocation5 + $0x4d8] sm:$0xff] %v946
    %1203 = vst [vmem:[#allocation5 + $0x4e0] sm:$0xff] %v947
    %1204 = vst [vmem:[#allocation5 + $0x4e8] sm:$0xff] %v948
    %1205 = vst [vmem:[#allocation5 + $0x4f0] sm:$0xff] %v949
    %1206 = vst [vmem:[#allocation5 + $0x4f8] sm:$0xff] %v950
    %1207 = vst [vmem:[#allocation5 + $0x500] sm:$0xff] %v951
    %1208 = vst [vmem:[#allocation5 + $0x508] sm:$0xff] %v952
    %1209 = vst [vmem:[#allocation5 + $0x510] sm:$0xff] %v953
    %1210 = vst [vmem:[#allocation5 + $0x518] sm:$0xff] %v954
    %1211 = vst [vmem:[#allocation5 + $0x520] sm:$0xff] %v955
    %1212 = vst [vmem:[#allocation5 + $0x528] sm:$0xff] %v956
    %1213 = vst [vmem:[#allocation5 + $0x530] sm:$0xff] %v957
    %1214 = vst [vmem:[#allocation5 + $0x538] sm:$0xff] %v958
    %1215 = vst [vmem:[#allocation5 + $0x540] sm:$0xff] %v959
    %1216 = vst [vmem:[#allocation5 + $0x548] sm:$0xff] %v960
    %1217 = vst [vmem:[#allocation5 + $0x550] sm:$0xff] %v961
    %1218 = vst [vmem:[#allocation5 + $0x558] sm:$0xff] %v962
    %1219 = vst [vmem:[#allocation5 + $0x560] sm:$0xff] %v963
    %1220 = vst [vmem:[#allocation5 + $0x568] sm:$0xff] %v964
    %1221 = vst [vmem:[#allocation5 + $0x570] sm:$0xff] %v965
    %1222 = vst [vmem:[#allocation5 + $0x578] sm:$0xff] %v966
    %1223 = vst [vmem:[#allocation5 + $0x580] sm:$0xff] %v967
    %1224 = vst [vmem:[#allocation5 + $0x588] sm:$0xff] %v968
    %1225 = vst [vmem:[#allocation5 + $0x590] sm:$0xff] %v969
    %1226 = vst [vmem:[#allocation5 + $0x598] sm:$0xff] %v970
    %1227 = vst [vmem:[#allocation5 + $0x5a0] sm:$0xff] %v971
    %1228 = vst [vmem:[#allocation5 + $0x5a8] sm:$0xff] %v972
    %1229 = vst [vmem:[#allocation5 + $0x5b0] sm:$0xff] %v973
    %1230 = vst [vmem:[#allocation5 + $0x5b8] sm:$0xff] %v974
    %1231 = vst [vmem:[#allocation5 + $0x5c0] sm:$0xff] %v975
    %1232 = vst [vmem:[#allocation5 + $0x5c8] sm:$0xff] %v976
    %1233 = vst [vmem:[#allocation5 + $0x5d0] sm:$0xff] %v977
    %1234 = vst [vmem:[#allocation5 + $0x5d8] sm:$0xff] %v978
    %1235 = vst [vmem:[#allocation5 + $0x5e0] sm:$0xff] %v979
    %1236 = vst [vmem:[#allocation5 + $0x5e8] sm:$0xff] %v980
    %1237 = vst [vmem:[#allocation5 + $0x5f0] sm:$0xff] %v981
    %1238 = vst [vmem:[#allocation5 + $0x5f8] sm:$0xff] %v982
    %1239 = vst [vmem:[#allocation5 + $0x600] sm:$0xff] %v983
    %1240 = vst [vmem:[#allocation5 + $0x608] sm:$0xff] %v984
    %1241 = vst [vmem:[#allocation5 + $0x610] sm:$0xff] %v985
    %1242 = vst [vmem:[#allocation5 + $0x618] sm:$0xff] %v986
    %1243 = vst [vmem:[#allocation5 + $0x620] sm:$0xff] %v987
    %1244 = vst [vmem:[#allocation5 + $0x628] sm:$0xff] %v988
    %1245 = vst [vmem:[#allocation5 + $0x630] sm:$0xff] %v989
    %1246 = vst [vmem:[#allocation5 + $0x638] sm:$0xff] %v990
    %1247 = vst [vmem:[#allocation5 + $0x640] sm:$0xff] %v991
    %1248 = vst [vmem:[#allocation5 + $0x648] sm:$0xff] %v992
    %1249 = vst [vmem:[#allocation5 + $0x650] sm:$0xff] %v993
    %1250 = vst [vmem:[#allocation5 + $0x658] sm:$0xff] %v994
    %1251 = vst [vmem:[#allocation5 + $0x660] sm:$0xff] %v995
    %1252 = vst [vmem:[#allocation5 + $0x668] sm:$0xff] %v996
    %1253 = vst [vmem:[#allocation5 + $0x670] sm:$0xff] %v997
    %1254 = vst [vmem:[#allocation5 + $0x678] sm:$0xff] %v998
    %1255 = vst [vmem:[#allocation5 + $0x680] sm:$0xff] %v999
    %1256 = vst [vmem:[#allocation5 + $0x688] sm:$0xff] %v1000
    %1257 = vst [vmem:[#allocation5 + $0x690] sm:$0xff] %v1001
    %1258 = vst [vmem:[#allocation5 + $0x698] sm:$0xff] %v1002
    %1259 = vst [vmem:[#allocation5 + $0x6a0] sm:$0xff] %v1003
    %1260 = vst [vmem:[#allocation5 + $0x6a8] sm:$0xff] %v1004
    %1261 = vst [vmem:[#allocation5 + $0x6b0] sm:$0xff] %v1005
    %1262 = vst [vmem:[#allocation5 + $0x6b8] sm:$0xff] %v1006
    %1263 = vst [vmem:[#allocation5 + $0x6c0] sm:$0xff] %v1007
    %1264 = vst [vmem:[#allocation5 + $0x6c8] sm:$0xff] %v1008
    %1265 = vst [vmem:[#allocation5 + $0x6d0] sm:$0xff] %v1009
    %1266 = vst [vmem:[#allocation5 + $0x6d8] sm:$0xff] %v1010
    %1267 = vst [vmem:[#allocation5 + $0x6e0] sm:$0xff] %v1011
    %1268 = vst [vmem:[#allocation5 + $0x6e8] sm:$0xff] %v1012
    %1269 = vst [vmem:[#allocation5 + $0x6f0] sm:$0xff] %v1013
    %1270 = vst [vmem:[#allocation5 + $0x6f8] sm:$0xff] %v1014
    %1271 = vst [vmem:[#allocation5 + $0x700] sm:$0xff] %v1015
    %1272 = vst [vmem:[#allocation5 + $0x708] sm:$0xff] %v1016
    %1273 = vst [vmem:[#allocation5 + $0x710] sm:$0xff] %v1017
    %1274 = vst [vmem:[#allocation5 + $0x718] sm:$0xff] %v1018
    %1275 = vst [vmem:[#allocation5 + $0x720] sm:$0xff] %v1019
    %1276 = vst [vmem:[#allocation5 + $0x728] sm:$0xff] %v1020
    %1277 = vst [vmem:[#allocation5 + $0x730] sm:$0xff] %v1021
    %1278 = vst [vmem:[#allocation5 + $0x738] sm:$0xff] %v1022
    %1279 = vst [vmem:[#allocation5 + $0x740] sm:$0xff] %v1023
    %1280 = vst [vmem:[#allocation5 + $0x748] sm:$0xff] %v1024
    %1281 = vst [vmem:[#allocation5 + $0x750] sm:$0xff] %v1025
    %1282 = vst [vmem:[#allocation5 + $0x758] sm:$0xff] %v1026
    %1283 = vst [vmem:[#allocation5 + $0x760] sm:$0xff] %v1027
    %1284 = vst [vmem:[#allocation5 + $0x768] sm:$0xff] %v1028
    %1285 = vst [vmem:[#allocation5 + $0x770] sm:$0xff] %v1029
    %1286 = vst [vmem:[#allocation5 + $0x778] sm:$0xff] %v1030
    %1287 = vst [vmem:[#allocation5 + $0x780] sm:$0xff] %v1031
    %1288 = vst [vmem:[#allocation5 + $0x788] sm:$0xff] %v1032
    %1289 = vst [vmem:[#allocation5 + $0x790] sm:$0xff] %v1033
    %1290 = vst [vmem:[#allocation5 + $0x798] sm:$0xff] %v1034
    %1291 = vst [vmem:[#allocation5 + $0x7a0] sm:$0xff] %v1035
    %1292 = vst [vmem:[#allocation5 + $0x7a8] sm:$0xff] %v1036
    %1293 = vst [vmem:[#allocation5 + $0x7b0] sm:$0xff] %v1037
    %1294 = vst [vmem:[#allocation5 + $0x7b8] sm:$0xff] %v1038
    %1295 = vst [vmem:[#allocation5 + $0x7c0] sm:$0xff] %v1039
    %1296 = vst [vmem:[#allocation5 + $0x7c8] sm:$0xff] %v1040
    %1297 = vst [vmem:[#allocation5 + $0x7d0] sm:$0xff] %v1041
    %1298 = vst [vmem:[#allocation5 + $0x7d8] sm:$0xff] %v1042
    %1299 = vst [vmem:[#allocation5 + $0x7e0] sm:$0xff] %v1043
    %1300 = vst [vmem:[#allocation5 + $0x7e8] sm:$0xff] %v1044
    %1301 = vst [vmem:[#allocation5 + $0x7f0] sm:$0xff] %v1045
    %1302 = vst [vmem:[#allocation5 + $0x7f8] sm:$0xff] %v1046
    // Predicated region
    $region10: #{tpu_custom_call.1} parent=1 // pred_check
      _
    $region11: #{tpu_custom_call.1} parent=1 // pred_check_branch
      %1304 = sbr.rel (0) target = $region13
    $region12: #{tpu_custom_call.1} parent=1 // pred_region
      %s1306 = ssub.s32 32768, 32768
      %1307 = vsyncadd [#allocation4], %s1306
      %s1308 = sshll.u32 [#allocation5], 4
      %s1309 = int_to_ptr.vmem [resolvable:$true] %s1308
      %1314 = dma.vmem_to_hbm [thread:$0]  %s1309, 32768, %s1, [#allocation4], 1024, 1024, 64
    $region13: #{tpu_custom_call.1} parent=1 // pred_fallthru
      _
    // Predicated region
    $region14: #{tpu_custom_call.1} parent=1 // pred_check
      _
    $region15: #{tpu_custom_call.1} parent=1 // pred_check_branch
      %1316 = sbr.rel (0) target = $region17
    $region16: #{tpu_custom_call.1} parent=1 // pred_region
      %1317 = dma.done [#allocation4], 32768
    $region17: #{tpu_custom_call.1} parent=1 // pred_fallthru
      _
    %1318 = vsyncpa [#allocation3], 1
    %1319 = vsyncpa [#allocation4], 1

</llo_original>
